<compile_context>
chip_gen: v6e
topology: v6e:2x2x1
jax: 0.10.0
libtpu: 0.0.40
codegen_flags: <defaults>
</compile_context>

<pallas_src>
import jax
import jax.numpy as jnp
from jax.experimental import pallas as pl
from jax.experimental.pallas import tpu as pltpu


def _general_attention_kernel(q_ref, v_ref, w_ref, ctx_ref, aw_ref):
    # q_ref: (Bt, Lq, H), v_ref: (Bt, Lv, D), w_ref: (H, D)
    q = q_ref[...]
    v = v_ref[...]
    w = w_ref[...]

    # Projection attn(values) = values @ W^T over the whole (Bt*Lv)-row block.
    # Contraction over the last dims -> no explicit transpose; f32 MXU accumulator,
    # result cast back to the native input dtype so the next matmul is also native.
    kv = jnp.einsum(
        "bvd,hd->bvh", v, w, preferred_element_type=jnp.float32
    ).astype(q.dtype)                                        # (Bt, Lv, H)

    # scores = query @ attn(values)^T, f32 accumulator.
    scores = jnp.einsum(
        "bqh,bvh->bqv", q, kv, preferred_element_type=jnp.float32
    )                                                        # (Bt, Lq, Lv)

    # Numerically stable softmax in f32; reciprocal on the (otherwise idle) EUP slot.
    m = jnp.max(scores, axis=-1, keepdims=True)
    e = jnp.exp(scores - m)
    denom = jnp.sum(e, axis=-1, keepdims=True)
    weights = e * pl.reciprocal(denom, approx=True)          # (Bt, Lq, Lv), f32

    # context = weights @ values; probabilities cast to the values dtype for the MXU.
    ctx = jnp.einsum(
        "bqv,bvd->bqd", weights.astype(v.dtype), v, preferred_element_type=jnp.float32
    )                                                        # (Bt, Lq, D)

    ctx_ref[...] = ctx.astype(ctx_ref.dtype)
    aw_ref[...] = weights.astype(aw_ref.dtype)


def general_attention(query, values, weight, *, block_b=None):
    """query: (B, Lq, H), values: (B, Lv, D), weight: (H, D) [nn.Linear(D, D, bias=False)].

    Returns (context (B, Lq, D), attention_weights (B, Lq, Lv))."""
    B, Lq, H = query.shape
    Bv, Lv, D = values.shape
    assert B == Bv and weight.shape == (H, D)

    itemsize = jnp.dtype(query.dtype).itemsize

    if block_b is None:
        # Bytes touched per batch per step: native-dtype in/out blocks plus the
        # f32 softmax intermediates (scores, exp, weights).  Target ~4 MiB of
        # block data per grid step so Pallas' double-buffering stays well inside
        # the default scoped VMEM even on v5e (16 MiB) / v7x (32 MiB of 64 MiB).
        per_batch = (
            itemsize * (Lq * H + Lv * D + Lq * D + Lv * H + Lq * Lv)
            + 4 * 3 * Lq * Lv
        )
        target = max(1, min(B, (4 << 20) // max(per_batch, 1)))
        # Largest divisor of B within budget -> no padded partial blocks.
        block_b = max(d for d in range(1, target + 1) if B % d == 0)

    assert B % block_b == 0
    grid = (B // block_b,)

    aw_dtype = query.dtype  # matches torch.softmax output dtype for the same inputs

    cost = pl.CostEstimate(
        flops=2 * B * (Lv * D * H + Lq * H * Lv + Lq * Lv * D),
        transcendentals=B * Lq * Lv,
        bytes_accessed=(
            itemsize * (B * Lq * H + B * Lv * D + H * D + B * Lq * D)
            + jnp.dtype(aw_dtype).itemsize * B * Lq * Lv
        ),
    )

    return pl.pallas_call(
        _general_attention_kernel,
        out_shape=(
            jax.ShapeDtypeStruct((B, Lq, D), query.dtype),   # context
            jax.ShapeDtypeStruct((B, Lq, Lv), aw_dtype),     # attention weights
        ),
        grid_spec=pltpu.PrefetchScalarGridSpec(
            num_scalar_prefetch=0,
            grid=grid,
            in_specs=[
                pl.BlockSpec((block_b, Lq, H), lambda b: (b, 0, 0)),
                pl.BlockSpec((block_b, Lv, D), lambda b: (b, 0, 0)),
                pl.BlockSpec((H, D), lambda b: (0, 0)),
            ],
            out_specs=[
                pl.BlockSpec((block_b, Lq, D), lambda b: (b, 0, 0)),
                pl.BlockSpec((block_b, Lq, Lv), lambda b: (b, 0, 0)),
            ],
        ),
        compiler_params=pltpu.CompilerParams(
            dimension_semantics=("parallel",),
        ),
        cost_estimate=cost,
    )(query, values, weight)


if __name__ == "__main__":
    # Small shapes consistent with the module: input_dim = 32 (so H == D == 32),
    # batch = 2, Lq = 8, Lv = 16.
    B, Lq, Lv, D = 2, 8, 16, 32

    key = jax.random.PRNGKey(0)
    kq, kv_, kw = jax.random.split(key, 3)
    query = jax.random.normal(kq, (B, Lq, D), dtype=jnp.float32)
    values = jax.random.normal(kv_, (B, Lv, D), dtype=jnp.float32)
    # Deterministic stand-in for nn.Linear(D, D, bias=False).weight : (D, D)
    weight = jax.random.normal(kw, (D, D), dtype=jnp.float32) * 0.1

    context, attn_weights = general_attention(query, values, weight)
    jax.block_until_ready((context, attn_weights))

    # Pure-JAX reference (same math, no Pallas).
    kv_ref = jnp.einsum("bvd,hd->bvh", values, weight)
    scores_ref = jnp.einsum("bqh,bvh->bqv", query, kv_ref)
    w_ref = jax.nn.softmax(scores_ref, axis=-1)
    ctx_ref = jnp.einsum("bqv,bvd->bqd", w_ref, values)

    # Tolerance accounts for the EUP approximate reciprocal in the softmax.
    assert jnp.allclose(context, ctx_ref, atol=1e-2, rtol=1e-2)
    assert jnp.allclose(attn_weights.astype(jnp.float32), w_ref, atol=1e-2, rtol=1e-2)

    print("KERNEL_OK")
</pallas_src>

<mosaic_0001>
module attributes {stable_mosaic.version = 11 : i64} {
  func.func @_general_attention_kernel(%arg0: i32, %arg1: memref<2x8x32xf32, #tpu.memory_space<vmem>>, %arg2: memref<2x16x32xf32, #tpu.memory_space<vmem>>, %arg3: memref<32x32xf32, #tpu.memory_space<vmem>>, %arg4: memref<2x8x32xf32, #tpu.memory_space<vmem>>, %arg5: memref<2x8x16xf32, #tpu.memory_space<vmem>>) attributes {dimension_semantics = [#tpu.dimension_semantics<parallel>], iteration_bounds = array<i64: 1>, scalar_prefetch = 0 : i64, scratch_operands = 0 : i64, tpu.core_type = #tpu.core_type<tc>, window_params = [{transform_indices = @transform_0, window_bounds = array<i64: 2, 8, 32>}, {transform_indices = @transform_1, window_bounds = array<i64: 2, 16, 32>}, {pipeline_mode = #tpu.pipeline_mode<synchronous>, transform_indices = @transform_2, window_bounds = array<i64: 32, 32>}, {transform_indices = @transform_3, window_bounds = array<i64: 2, 8, 32>}, {transform_indices = @transform_4, window_bounds = array<i64: 2, 8, 16>}]} {
    %c0 = arith.constant 0 : index
    %c0_0 = arith.constant 0 : index
    %c0_1 = arith.constant 0 : index
    %0 = vector.load %arg1[%c0, %c0_0, %c0_1] : memref<2x8x32xf32, #tpu.memory_space<vmem>>, vector<2x8x32xf32>
    %c0_2 = arith.constant 0 : index
    %c0_3 = arith.constant 0 : index
    %c0_4 = arith.constant 0 : index
    %1 = vector.load %arg2[%c0_2, %c0_3, %c0_4] : memref<2x16x32xf32, #tpu.memory_space<vmem>>, vector<2x16x32xf32>
    %c0_5 = arith.constant 0 : index
    %c0_6 = arith.constant 0 : index
    %2 = vector.load %arg3[%c0_5, %c0_6] : memref<32x32xf32, #tpu.memory_space<vmem>>, vector<32x32xf32>
    "tpu.trace_start"() <{level = 10 : i32, message = "bvd,hd->bvh"}> : () -> ()
    %cst = arith.constant dense<0.000000e+00> : vector<2x16x32xf32>
    %3 = tpu.matmul %1, %2, %cst {dimension_numbers = #tpu.dot_dimension_numbers<[2], [1], [0, 1], [0], [0, 0, 0, 1, 1, 0], [], []>} : vector<2x16x32xf32>, vector<32x32xf32>, vector<2x16x32xf32> -> vector<2x16x32xf32>
    "tpu.trace_stop"() : () -> ()
    "tpu.trace_start"() <{level = 10 : i32, message = "bqh,bvh->bqv"}> : () -> ()
    %cst_7 = arith.constant dense<0.000000e+00> : vector<2x8x16xf32>
    %4 = tpu.matmul %0, %3, %cst_7 {dimension_numbers = #tpu.dot_dimension_numbers<[2], [2], [1], [1], [0, 0, 0, 1, 1, 1], [0], [0]>} : vector<2x8x32xf32>, vector<2x16x32xf32>, vector<2x8x16xf32> -> vector<2x8x16xf32>
    "tpu.trace_stop"() : () -> ()
    %cst_8 = arith.constant dense<0xFF800000> : vector<2x8xf32>
    %5 = vector.multi_reduction <maximumf>, %4, %cst_8 [2] : vector<2x8x16xf32> to vector<2x8xf32>
    %6 = vector.shape_cast %5 : vector<2x8xf32> to vector<2x8x1xf32>
    %7 = vector.broadcast %6 : vector<2x8x1xf32> to vector<2x8x16xf32>
    %8 = arith.subf %4, %7 : vector<2x8x16xf32>
    %9 = math.exp %8 : vector<2x8x16xf32>
    %cst_9 = arith.constant dense<0.000000e+00> : vector<2x8xf32>
    %10 = vector.multi_reduction <add>, %9, %cst_9 [2] : vector<2x8x16xf32> to vector<2x8xf32>
    %11 = vector.shape_cast %10 : vector<2x8xf32> to vector<2x8x1xf32>
    %12 = tpu.reciprocal %11 {approx = true} : vector<2x8x1xf32> -> vector<2x8x1xf32>
    %13 = vector.broadcast %12 : vector<2x8x1xf32> to vector<2x8x16xf32>
    %14 = arith.mulf %9, %13 : vector<2x8x16xf32>
    "tpu.trace_start"() <{level = 10 : i32, message = "bqv,bvd->bqd"}> : () -> ()
    %cst_10 = arith.constant dense<0.000000e+00> : vector<2x8x32xf32>
    %15 = tpu.matmul %14, %1, %cst_10 {dimension_numbers = #tpu.dot_dimension_numbers<[2], [1], [1], [2], [0, 0, 0, 1, 1, 2], [0], [0]>} : vector<2x8x16xf32>, vector<2x16x32xf32>, vector<2x8x32xf32> -> vector<2x8x32xf32>
    "tpu.trace_stop"() : () -> ()
    %c0_11 = arith.constant 0 : index
    %c0_12 = arith.constant 0 : index
    %c0_13 = arith.constant 0 : index
    %16 = vector.load %arg4[%c0_11, %c0_12, %c0_13] : memref<2x8x32xf32, #tpu.memory_space<vmem>>, vector<2x8x32xf32>
    tpu.vector_store %arg4[%c0_11, %c0_12, %c0_13], %15 {strides = array<i32>} : memref<2x8x32xf32, #tpu.memory_space<vmem>>, vector<2x8x32xf32>,
    %c0_14 = arith.constant 0 : index
    %c0_15 = arith.constant 0 : index
    %c0_16 = arith.constant 0 : index
    %17 = vector.load %arg5[%c0_14, %c0_15, %c0_16] : memref<2x8x16xf32, #tpu.memory_space<vmem>>, vector<2x8x16xf32>
    tpu.vector_store %arg5[%c0_14, %c0_15, %c0_16], %14 {strides = array<i32>} : memref<2x8x16xf32, #tpu.memory_space<vmem>>, vector<2x8x16xf32>,
    return
  }
  func.func @transform_0(%arg0: i32) -> (i32, i32, i32) {
    %c0_i32 = arith.constant 0 : i32
    %c0_i32_0 = arith.constant 0 : i32
    %c0_i32_1 = arith.constant 0 : i32
    return %arg0, %c0_i32, %c0_i32_0 : i32, i32, i32
  }
  func.func @transform_1(%arg0: i32) -> (i32, i32, i32) {
    %c0_i32 = arith.constant 0 : i32
    %c0_i32_0 = arith.constant 0 : i32
    %c0_i32_1 = arith.constant 0 : i32
    return %arg0, %c0_i32, %c0_i32_0 : i32, i32, i32
  }
  func.func @transform_2(%arg0: i32) -> (i32, i32) {
    %c0_i32 = arith.constant 0 : i32
    %c0_i32_0 = arith.constant 0 : i32
    %c0_i32_1 = arith.constant 0 : i32
    return %c0_i32, %c0_i32_0 : i32, i32
  }
  func.func @transform_3(%arg0: i32) -> (i32, i32, i32) {
    %c0_i32 = arith.constant 0 : i32
    %c0_i32_0 = arith.constant 0 : i32
    %c0_i32_1 = arith.constant 0 : i32
    return %arg0, %c0_i32, %c0_i32_0 : i32, i32, i32
  }
  func.func @transform_4(%arg0: i32) -> (i32, i32, i32) {
    %c0_i32 = arith.constant 0 : i32
    %c0_i32_0 = arith.constant 0 : i32
    %c0_i32_1 = arith.constant 0 : i32
    return %arg0, %c0_i32, %c0_i32_0 : i32, i32, i32
  }
}

</mosaic_0001>

<llo_original>
// kernel: tpu_custom_call.1
$region0: #{tpu_custom_call.1}
  #allocation0 [shape = 'u32[]', space=smem, size = 0x4, offset = 0x4, fixed_abs, tag = 'smem constant byte address 0x4 - core index']
  #allocation1 [shape = 'u32[144,128]{1,0:T(1,128)}', space=vmem, size = 0x12000, scoped, tag = 'internal scratch']
  %s0 = inlined_call_operand.hbm [shape: f32[2,8,32], index: 0, kind: input, shape index: {}]
  %s1 = inlined_call_operand.hbm [shape: f32[2,16,32], index: 1, kind: input, shape index: {}]
  %s2 = inlined_call_operand.hbm [shape: f32[32,32], index: 2, kind: input, shape index: {}]
  %s3 = inlined_call_operand.hbm [shape: f32[2,8,32], index: 3, kind: output, shape index: {0}]
  %s4 = inlined_call_operand.hbm [shape: f32[2,8,16], index: 4, kind: output, shape index: {1}]
  %5 = xla_tuple %s3, %s4
  %s6 = sld [smem:[#allocation0]]
  $region42: #{tpu_custom_call.1} parent=0
    _
  %s8 = ssub.s32 1, %s6
  %s9 = scalar_select 0, %s8, %s6
  $region1: #{tpu_custom_call.1} parent=0
    #allocation2 [shape = 'u8[8192]{0}', space=vmem, size = 0x2000, scoped, tag = 'input window, operand 0, single buffered']
    #allocation3 [shape = 's32[1]{0}', space=sflag, size = 0x4, scoped, tag = 'scoped memory for tpu_custom_call.1']
    #allocation4 [shape = 's32[1]{0}', space=sflag, size = 0x4, scoped, tag = 'scoped memory for tpu_custom_call.1']
    #allocation5 [shape = 'u8[16384]{0}', space=vmem, size = 0x4000, scoped, tag = 'input window, operand 1, single buffered']
    #allocation6 [shape = 's32[1]{0}', space=sflag, size = 0x4, scoped, tag = 'scoped memory for tpu_custom_call.1']
    #allocation7 [shape = 'u8[16384]{0}', space=vmem, size = 0x4000, scoped, tag = 'input window, operand 2, single buffered']
    #allocation8 [shape = 'u8[8192]{0}', space=vmem, size = 0x2000, scoped, tag = 'output window, operand 0, single buffered']
    #allocation9 [shape = 'u8[8192]{0}', space=vmem, size = 0x2000, scoped, tag = 'output window, operand 1, single buffered']
    #allocation10 [shape = 's32[1]{0}', space=sflag, size = 0x4, scoped, tag = 'scoped memory for tpu_custom_call.1']
    %10 = vsyncpa [#allocation3], 0
    %11 = vsyncpa [#allocation6], 0
    %12 = vsyncpa [#allocation4], 0
    %13 = vsyncpa [#allocation10], 0
    // Predicated region
    $region2: #{tpu_custom_call.1} parent=1 // pred_check
      _
    $region3: #{tpu_custom_call.1} parent=1 // pred_check_branch
      %15 = sbr.rel (0) target = $region5
    $region4: #{tpu_custom_call.1} parent=1 // pred_region
      %s17 = ssub.s32 256, 256
      %18 = vsyncadd [#allocation3], %s17
      %s19 = sshll.u32 [#allocation2], 4
      %s20 = int_to_ptr.vmem [resolvable:$true] %s19
      %25 = dma.hbm_to_vmem [thread:$0]  %s0, 256, %s20, [#allocation3], 128, 128, 8
    $region5: #{tpu_custom_call.1} parent=1 // pred_fallthru
      _
    // Predicated region
    $region6: #{tpu_custom_call.1} parent=1 // pred_check
      _
    $region7: #{tpu_custom_call.1} parent=1 // pred_check_branch
      %27 = sbr.rel (0) target = $region9
    $region8: #{tpu_custom_call.1} parent=1 // pred_region
      %s29 = ssub.s32 512, 512
      %30 = vsyncadd [#allocation6], %s29
      %s31 = sshll.u32 [#allocation5], 4
      %s32 = int_to_ptr.vmem [resolvable:$true] %s31
      %37 = dma.hbm_to_vmem [thread:$0]  %s1, 512, %s32, [#allocation6], 128, 128, 8
    $region9: #{tpu_custom_call.1} parent=1 // pred_fallthru
      _
    // Predicated region
    $region10: #{tpu_custom_call.1} parent=1 // pred_check
      _
    $region11: #{tpu_custom_call.1} parent=1 // pred_check_branch
      %39 = sbr.rel (0) target = $region13
    $region12: #{tpu_custom_call.1} parent=1 // pred_region
      %s41 = ssub.s32 512, 512
      %42 = vsyncadd [#allocation6], %s41
      %s43 = sshll.u32 [#allocation7], 4
      %s44 = int_to_ptr.vmem [resolvable:$true] %s43
      %49 = dma.hbm_to_vmem [thread:$0]  %s2, 512, %s44, [#allocation6], 128, 128, 8
    $region13: #{tpu_custom_call.1} parent=1 // pred_fallthru
      _
    // Predicated region
    $region14: #{tpu_custom_call.1} parent=1 // pred_check
      _
    $region15: #{tpu_custom_call.1} parent=1 // pred_check_branch
      %51 = sbr.rel (0) target = $region17
    $region16: #{tpu_custom_call.1} parent=1 // pred_region
      %52 = dma.done [#allocation3], 256
    $region17: #{tpu_custom_call.1} parent=1 // pred_fallthru
      _
    // Predicated region
    $region18: #{tpu_custom_call.1} parent=1 // pred_check
      _
    $region19: #{tpu_custom_call.1} parent=1 // pred_check_branch
      %54 = sbr.rel (0) target = $region21
    $region20: #{tpu_custom_call.1} parent=1 // pred_region
      %55 = dma.done [#allocation6], 512
    $region21: #{tpu_custom_call.1} parent=1 // pred_fallthru
      _
    // Predicated region
    $region22: #{tpu_custom_call.1} parent=1 // pred_check
      _
    $region23: #{tpu_custom_call.1} parent=1 // pred_check_branch
      %57 = sbr.rel (0) target = $region25
    $region24: #{tpu_custom_call.1} parent=1 // pred_region
      %58 = dma.done [#allocation6], 512
    $region25: #{tpu_custom_call.1} parent=1 // pred_fallthru
      _
    %v59 = vld [vmem:[#allocation2] sm:$0xff]
    %v60 = vld [vmem:[#allocation2 + $0x8] sm:$0xff]
    %v61 = vld [vmem:[#allocation5] sm:$0xff]
    %v62 = vld [vmem:[#allocation5 + $0x8] sm:$0xff]
    %v63 = vld [vmem:[#allocation5 + $0x10] sm:$0xff]
    %v64 = vld [vmem:[#allocation5 + $0x18] sm:$0xff]
    %v65 = vld [vmem:[#allocation7] sm:$0xff]
    %v66 = vld [vmem:[#allocation7 + $0x8] sm:$0xff]
    %v67 = vld [vmem:[#allocation7 + $0x10] sm:$0xff]
    %v68 = vld [vmem:[#allocation7 + $0x18] sm:$0xff]
    %vm69 = vcmask 261120
    %v71 = vsel %vm69, %v61, 0
    %v74 = vsel %vm69, %v62, 0
    %v77 = vsel %vm69, %v63, 0
    %v80 = vsel %vm69, %v64, 0
    %v83 = vsel %vm69, %v65, 0
    %v86 = vsel %vm69, %v66, 0
    %v89 = vsel %vm69, %v67, 0
    %v92 = vsel %vm69, %v68, 0
    %94 = vmatprep.subr.mxu0 0.0
    %95 = vmatpush1.xpose.msra.mxu0 0.0
    %96 = vmatprep.subr.mxu0 0.0
    %97 = vmatpush1.xpose.msra.mxu0 0.0
    %98 = vmatprep.subr.mxu0 0.0
    %99 = vmatpush1.xpose.msra.mxu0 0.0
    %100 = vmatprep.subr.mxu0 0.0
    %101 = vmatpush1.xpose.msra.mxu0 0.0
    %102 = vmatprep.subr.mxu0 0.0
    %103 = vmatpush1.xpose.msra.mxu0 0.0
    %104 = vmatprep.subr.mxu0 0.0
    %105 = vmatpush1.xpose.msra.mxu0 0.0
    %106 = vmatprep.subr.mxu0 0.0
    %107 = vmatpush1.xpose.msra.mxu0 0.0
    %108 = vmatprep.subr.mxu0 0.0
    %109 = vmatpush1.xpose.msra.mxu0 0.0
    %110 = vmatprep.subr.mxu0 0.0
    %111 = vmatpush1.xpose.msra.mxu0 0.0
    %112 = vmatprep.subr.mxu0 0.0
    %113 = vmatpush1.xpose.msra.mxu0 0.0
    %114 = vmatprep.subr.mxu0 0.0
    %115 = vmatpush1.xpose.msra.mxu0 0.0
    %116 = vmatprep.subr.mxu0 0.0
    %117 = vmatpush1.xpose.msra.mxu0 0.0
    %118 = vmatprep.subr.mxu0 0.0
    %119 = vmatpush1.xpose.msra.mxu0 %v92
    %120 = vmatprep.subr.mxu0 0.0
    %121 = vmatpush1.xpose.msra.mxu0 %v89
    %122 = vmatprep.subr.mxu0 0.0
    %123 = vmatpush1.xpose.msra.mxu0 %v86
    %124 = vmatprep.subr.mxu0 0.0
    %125 = vmatpush1.xpose.msra.mxu0 %v83
    %126 = vmatprep.subr.mxu0 0.0
    %127 = vmatpush2.xpose.msra.mxu0 0.0
    %128 = vmatprep.subr.mxu0 0.0
    %129 = vmatpush2.xpose.msra.mxu0 0.0
    %130 = vmatprep.subr.mxu0 0.0
    %131 = vmatpush2.xpose.msra.mxu0 0.0
    %132 = vmatprep.subr.mxu0 0.0
    %133 = vmatpush2.xpose.msra.mxu0 0.0
    %134 = vmatprep.subr.mxu0 0.0
    %135 = vmatpush2.xpose.msra.mxu0 0.0
    %136 = vmatprep.subr.mxu0 0.0
    %137 = vmatpush2.xpose.msra.mxu0 0.0
    %138 = vmatprep.subr.mxu0 0.0
    %139 = vmatpush2.xpose.msra.mxu0 0.0
    %140 = vmatprep.subr.mxu0 0.0
    %141 = vmatpush2.xpose.msra.mxu0 0.0
    %142 = vmatprep.subr.mxu0 0.0
    %143 = vmatpush2.xpose.msra.mxu0 0.0
    %144 = vmatprep.subr.mxu0 0.0
    %145 = vmatpush2.xpose.msra.mxu0 0.0
    %146 = vmatprep.subr.mxu0 0.0
    %147 = vmatpush2.xpose.msra.mxu0 0.0
    %148 = vmatprep.subr.mxu0 0.0
    %149 = vmatpush2.xpose.msra.mxu0 0.0
    %150 = vmatprep.subr.mxu0 0.0
    %151 = vmatpush2.xpose.msra.mxu0 0.0
    %152 = vmatprep.subr.mxu0 0.0
    %153 = vmatpush2.xpose.msra.mxu0 0.0
    %154 = vmatprep.subr.mxu0 0.0
    %155 = vmatpush2.xpose.msra.mxu0 0.0
    %156 = vmatprep.subr.mxu0 0.0
    %157 = vmatpush2.xpose.msra.mxu0 0.0
    %158 = vmatprep.mubr.f32.mxu0 0.0
    %159 = vmatmul.mubr.f32.gmra.mxu0 %v71
    %v160 = vpop.f32.mrf.mxu0
    %v161 = vadd.f32 0.0, %v160
    %v162 = vpop.f32.mrf.mxu0
    %163 = vmatprep.mubr.f32.mxu0 0.0
    %164 = vmatmul.mubr.f32.gmra.mxu0 %v74
    %v165 = vpop.f32.mrf.mxu0
    %v166 = vadd.f32 0.0, %v165
    %v167 = vpop.f32.mrf.mxu0
    %168 = vmatprep.mubr.f32.mxu0 0.0
    %169 = vmatmul.mubr.f32.gmra.mxu0 %v77
    %v170 = vpop.f32.mrf.mxu0
    %v171 = vadd.f32 0.0, %v170
    %v172 = vpop.f32.mrf.mxu0
    %173 = vmatprep.mubr.f32.mxu0 0.0
    %174 = vmatmul.mubr.f32.gmra.mxu0 %v80
    %v175 = vpop.f32.mrf.mxu0
    %v176 = vadd.f32 0.0, %v175
    %v177 = vpop.f32.mrf.mxu0
    %178 = vdwg.mxu0
    %v180 = vsel %vm69, %v59, 0
    %v183 = vsel %vm69, %v161, 0
    %v186 = vsel %vm69, %v166, 0
    %188 = vmatprep.subr.mxu0 0.0
    %189 = vmatpush1.xpose.msra.mxu0 0.0
    %190 = vmatprep.subr.mxu0 0.0
    %191 = vmatpush1.xpose.msra.mxu0 0.0
    %192 = vmatprep.subr.mxu0 0.0
    %193 = vmatpush1.xpose.msra.mxu0 0.0
    %194 = vmatprep.subr.mxu0 0.0
    %195 = vmatpush1.xpose.msra.mxu0 0.0
    %196 = vmatprep.subr.mxu0 0.0
    %197 = vmatpush1.xpose.msra.mxu0 0.0
    %198 = vmatprep.subr.mxu0 0.0
    %199 = vmatpush1.xpose.msra.mxu0 0.0
    %200 = vmatprep.subr.mxu0 0.0
    %201 = vmatpush1.xpose.msra.mxu0 0.0
    %202 = vmatprep.subr.mxu0 0.0
    %203 = vmatpush1.xpose.msra.mxu0 0.0
    %204 = vmatprep.subr.mxu0 0.0
    %205 = vmatpush1.xpose.msra.mxu0 0.0
    %206 = vmatprep.subr.mxu0 0.0
    %207 = vmatpush1.xpose.msra.mxu0 0.0
    %208 = vmatprep.subr.mxu0 0.0
    %209 = vmatpush1.xpose.msra.mxu0 0.0
    %210 = vmatprep.subr.mxu0 0.0
    %211 = vmatpush1.xpose.msra.mxu0 0.0
    %212 = vmatprep.subr.mxu0 0.0
    %213 = vmatpush1.xpose.msra.mxu0 0.0
    %214 = vmatprep.subr.mxu0 0.0
    %215 = vmatpush1.xpose.msra.mxu0 0.0
    %216 = vmatprep.subr.mxu0 0.0
    %217 = vmatpush1.xpose.msra.mxu0 %v186
    %218 = vmatprep.subr.mxu0 0.0
    %219 = vmatpush1.xpose.msra.mxu0 %v183
    %220 = vmatprep.subr.mxu0 0.0
    %221 = vmatpush2.xpose.msra.mxu0 0.0
    %222 = vmatprep.subr.mxu0 0.0
    %223 = vmatpush2.xpose.msra.mxu0 0.0
    %224 = vmatprep.subr.mxu0 0.0
    %225 = vmatpush2.xpose.msra.mxu0 0.0
    %226 = vmatprep.subr.mxu0 0.0
    %227 = vmatpush2.xpose.msra.mxu0 0.0
    %228 = vmatprep.subr.mxu0 0.0
    %229 = vmatpush2.xpose.msra.mxu0 0.0
    %230 = vmatprep.subr.mxu0 0.0
    %231 = vmatpush2.xpose.msra.mxu0 0.0
    %232 = vmatprep.subr.mxu0 0.0
    %233 = vmatpush2.xpose.msra.mxu0 0.0
    %234 = vmatprep.subr.mxu0 0.0
    %235 = vmatpush2.xpose.msra.mxu0 0.0
    %236 = vmatprep.subr.mxu0 0.0
    %237 = vmatpush2.xpose.msra.mxu0 0.0
    %238 = vmatprep.subr.mxu0 0.0
    %239 = vmatpush2.xpose.msra.mxu0 0.0
    %240 = vmatprep.subr.mxu0 0.0
    %241 = vmatpush2.xpose.msra.mxu0 0.0
    %242 = vmatprep.subr.mxu0 0.0
    %243 = vmatpush2.xpose.msra.mxu0 0.0
    %244 = vmatprep.subr.mxu0 0.0
    %245 = vmatpush2.xpose.msra.mxu0 0.0
    %246 = vmatprep.subr.mxu0 0.0
    %247 = vmatpush2.xpose.msra.mxu0 0.0
    %248 = vmatprep.subr.mxu0 0.0
    %249 = vmatpush2.xpose.msra.mxu0 0.0
    %250 = vmatprep.subr.mxu0 0.0
    %251 = vmatpush2.xpose.msra.mxu0 0.0
    %252 = vmatprep.mubr.f32.mxu0 0.0
    %253 = vmatmul.mubr.f32.gmra.mxu0 %v180
    %v254 = vpop.f32.mrf.mxu0
    %v255 = vadd.f32 0.0, %v254
    %v256 = vpop.f32.mrf.mxu0
    %257 = vdwg.mxu0
    %v259 = vsel %vm69, %v60, 0
    %v262 = vsel %vm69, %v171, 0
    %v265 = vsel %vm69, %v176, 0
    %267 = vmatprep.subr.mxu0 0.0
    %268 = vmatpush1.xpose.msra.mxu0 0.0
    %269 = vmatprep.subr.mxu0 0.0
    %270 = vmatpush1.xpose.msra.mxu0 0.0
    %271 = vmatprep.subr.mxu0 0.0
    %272 = vmatpush1.xpose.msra.mxu0 0.0
    %273 = vmatprep.subr.mxu0 0.0
    %274 = vmatpush1.xpose.msra.mxu0 0.0
    %275 = vmatprep.subr.mxu0 0.0
    %276 = vmatpush1.xpose.msra.mxu0 0.0
    %277 = vmatprep.subr.mxu0 0.0
    %278 = vmatpush1.xpose.msra.mxu0 0.0
    %279 = vmatprep.subr.mxu0 0.0
    %280 = vmatpush1.xpose.msra.mxu0 0.0
    %281 = vmatprep.subr.mxu0 0.0
    %282 = vmatpush1.xpose.msra.mxu0 0.0
    %283 = vmatprep.subr.mxu0 0.0
    %284 = vmatpush1.xpose.msra.mxu0 0.0
    %285 = vmatprep.subr.mxu0 0.0
    %286 = vmatpush1.xpose.msra.mxu0 0.0
    %287 = vmatprep.subr.mxu0 0.0
    %288 = vmatpush1.xpose.msra.mxu0 0.0
    %289 = vmatprep.subr.mxu0 0.0
    %290 = vmatpush1.xpose.msra.mxu0 0.0
    %291 = vmatprep.subr.mxu0 0.0
    %292 = vmatpush1.xpose.msra.mxu0 0.0
    %293 = vmatprep.subr.mxu0 0.0
    %294 = vmatpush1.xpose.msra.mxu0 0.0
    %295 = vmatprep.subr.mxu0 0.0
    %296 = vmatpush1.xpose.msra.mxu0 %v265
    %297 = vmatprep.subr.mxu0 0.0
    %298 = vmatpush1.xpose.msra.mxu0 %v262
    %299 = vmatprep.subr.mxu0 0.0
    %300 = vmatpush2.xpose.msra.mxu0 0.0
    %301 = vmatprep.subr.mxu0 0.0
    %302 = vmatpush2.xpose.msra.mxu0 0.0
    %303 = vmatprep.subr.mxu0 0.0
    %304 = vmatpush2.xpose.msra.mxu0 0.0
    %305 = vmatprep.subr.mxu0 0.0
    %306 = vmatpush2.xpose.msra.mxu0 0.0
    %307 = vmatprep.subr.mxu0 0.0
    %308 = vmatpush2.xpose.msra.mxu0 0.0
    %309 = vmatprep.subr.mxu0 0.0
    %310 = vmatpush2.xpose.msra.mxu0 0.0
    %311 = vmatprep.subr.mxu0 0.0
    %312 = vmatpush2.xpose.msra.mxu0 0.0
    %313 = vmatprep.subr.mxu0 0.0
    %314 = vmatpush2.xpose.msra.mxu0 0.0
    %315 = vmatprep.subr.mxu0 0.0
    %316 = vmatpush2.xpose.msra.mxu0 0.0
    %317 = vmatprep.subr.mxu0 0.0
    %318 = vmatpush2.xpose.msra.mxu0 0.0
    %319 = vmatprep.subr.mxu0 0.0
    %320 = vmatpush2.xpose.msra.mxu0 0.0
    %321 = vmatprep.subr.mxu0 0.0
    %322 = vmatpush2.xpose.msra.mxu0 0.0
    %323 = vmatprep.subr.mxu0 0.0
    %324 = vmatpush2.xpose.msra.mxu0 0.0
    %325 = vmatprep.subr.mxu0 0.0
    %326 = vmatpush2.xpose.msra.mxu0 0.0
    %327 = vmatprep.subr.mxu0 0.0
    %328 = vmatpush2.xpose.msra.mxu0 0.0
    %329 = vmatprep.subr.mxu0 0.0
    %330 = vmatpush2.xpose.msra.mxu0 0.0
    %331 = vmatprep.mubr.f32.mxu0 0.0
    %332 = vmatmul.mubr.f32.gmra.mxu0 %v259
    %v333 = vpop.f32.mrf.mxu0
    %v334 = vadd.f32 0.0, %v333
    %v335 = vpop.f32.mrf.mxu0
    %336 = vdwg.mxu0
    %vm337 = vcmask 130048
    %v338 = vsel %vm337, %v255, -inf
    %339 = vmax.xlane.f32.xlu0 %v338
    %v340 = vpop.xlane.xlu0 %339
    %v341 = vsel %vm337, %v334, -inf
    %342 = vmax.xlane.f32.xlu0 %v341
    %v343 = vpop.xlane.xlu0 %342
    %v344 = vsub.f32 %v255, %v340
    %v345 = vsub.f32 %v334, %v343
    %v346 = vmul.f32 %v344, 1.442695
    %v347 = vpow.pop %v346
    %v348 = vmul.f32 %v345, 1.442695
    %v349 = vpow.pop %v348
    %v350 = vsel %vm337, %v347, 0.0
    %351 = vadd.xlane.f32.xlu0 %v350
    %v352 = vpop.xlane.xlu0 %351
    %v353 = vsel %vm337, %v349, 0.0
    %354 = vadd.xlane.f32.xlu0 %v353
    %v355 = vpop.xlane.xlu0 %354
    %v356 = vrcp.pop %v352
    %v357 = vrcp.pop %v355
    %v358 = vmul.f32 %v347, %v356
    %v359 = vmul.f32 %v349, %v357
    %v361 = vsel %vm337, %v358, 0
    %363 = vmatprep.subr.mxu0 0.0
    %364 = vmatpush1.msra.mxu0 0.0
    %365 = vmatprep.subr.mxu0 0.0
    %366 = vmatpush1.msra.mxu0 0.0
    %367 = vmatprep.subr.mxu0 0.0
    %368 = vmatpush1.msra.mxu0 0.0
    %369 = vmatprep.subr.mxu0 0.0
    %370 = vmatpush1.msra.mxu0 0.0
    %371 = vmatprep.subr.mxu0 0.0
    %372 = vmatpush1.msra.mxu0 0.0
    %373 = vmatprep.subr.mxu0 0.0
    %374 = vmatpush1.msra.mxu0 0.0
    %375 = vmatprep.subr.mxu0 0.0
    %376 = vmatpush1.msra.mxu0 0.0
    %377 = vmatprep.subr.mxu0 0.0
    %378 = vmatpush1.msra.mxu0 0.0
    %379 = vmatprep.subr.mxu0 0.0
    %380 = vmatpush1.msra.mxu0 0.0
    %381 = vmatprep.subr.mxu0 0.0
    %382 = vmatpush1.msra.mxu0 0.0
    %383 = vmatprep.subr.mxu0 0.0
    %384 = vmatpush1.msra.mxu0 0.0
    %385 = vmatprep.subr.mxu0 0.0
    %386 = vmatpush1.msra.mxu0 0.0
    %387 = vmatprep.subr.mxu0 0.0
    %388 = vmatpush1.msra.mxu0 0.0
    %389 = vmatprep.subr.mxu0 0.0
    %390 = vmatpush1.msra.mxu0 0.0
    %391 = vmatprep.subr.mxu0 0.0
    %392 = vmatpush1.msra.mxu0 %v62
    %393 = vmatprep.subr.mxu0 0.0
    %394 = vmatpush1.msra.mxu0 %v61
    %395 = vmatprep.subr.mxu0 0.0
    %396 = vmatpush2.msra.mxu0 0.0
    %397 = vmatprep.subr.mxu0 0.0
    %398 = vmatpush2.msra.mxu0 0.0
    %399 = vmatprep.subr.mxu0 0.0
    %400 = vmatpush2.msra.mxu0 0.0
    %401 = vmatprep.subr.mxu0 0.0
    %402 = vmatpush2.msra.mxu0 0.0
    %403 = vmatprep.subr.mxu0 0.0
    %404 = vmatpush2.msra.mxu0 0.0
    %405 = vmatprep.subr.mxu0 0.0
    %406 = vmatpush2.msra.mxu0 0.0
    %407 = vmatprep.subr.mxu0 0.0
    %408 = vmatpush2.msra.mxu0 0.0
    %409 = vmatprep.subr.mxu0 0.0
    %410 = vmatpush2.msra.mxu0 0.0
    %411 = vmatprep.subr.mxu0 0.0
    %412 = vmatpush2.msra.mxu0 0.0
    %413 = vmatprep.subr.mxu0 0.0
    %414 = vmatpush2.msra.mxu0 0.0
    %415 = vmatprep.subr.mxu0 0.0
    %416 = vmatpush2.msra.mxu0 0.0
    %417 = vmatprep.subr.mxu0 0.0
    %418 = vmatpush2.msra.mxu0 0.0
    %419 = vmatprep.subr.mxu0 0.0
    %420 = vmatpush2.msra.mxu0 0.0
    %421 = vmatprep.subr.mxu0 0.0
    %422 = vmatpush2.msra.mxu0 0.0
    %423 = vmatprep.subr.mxu0 0.0
    %424 = vmatpush2.msra.mxu0 0.0
    %425 = vmatprep.subr.mxu0 0.0
    %426 = vmatpush2.msra.mxu0 0.0
    %427 = vmatprep.mubr.f32.mxu0 0.0
    %428 = vmatmul.mubr.f32.gmra.mxu0 %v361
    %v429 = vpop.f32.mrf.mxu0
    %v430 = vadd.f32 0.0, %v429
    %v431 = vpop.f32.mrf.mxu0
    %432 = vdwg.mxu0
    %v434 = vsel %vm337, %v359, 0
    %436 = vmatprep.subr.mxu0 0.0
    %437 = vmatpush1.msra.mxu0 0.0
    %438 = vmatprep.subr.mxu0 0.0
    %439 = vmatpush1.msra.mxu0 0.0
    %440 = vmatprep.subr.mxu0 0.0
    %441 = vmatpush1.msra.mxu0 0.0
    %442 = vmatprep.subr.mxu0 0.0
    %443 = vmatpush1.msra.mxu0 0.0
    %444 = vmatprep.subr.mxu0 0.0
    %445 = vmatpush1.msra.mxu0 0.0
    %446 = vmatprep.subr.mxu0 0.0
    %447 = vmatpush1.msra.mxu0 0.0
    %448 = vmatprep.subr.mxu0 0.0
    %449 = vmatpush1.msra.mxu0 0.0
    %450 = vmatprep.subr.mxu0 0.0
    %451 = vmatpush1.msra.mxu0 0.0
    %452 = vmatprep.subr.mxu0 0.0
    %453 = vmatpush1.msra.mxu0 0.0
    %454 = vmatprep.subr.mxu0 0.0
    %455 = vmatpush1.msra.mxu0 0.0
    %456 = vmatprep.subr.mxu0 0.0
    %457 = vmatpush1.msra.mxu0 0.0
    %458 = vmatprep.subr.mxu0 0.0
    %459 = vmatpush1.msra.mxu0 0.0
    %460 = vmatprep.subr.mxu0 0.0
    %461 = vmatpush1.msra.mxu0 0.0
    %462 = vmatprep.subr.mxu0 0.0
    %463 = vmatpush1.msra.mxu0 0.0
    %464 = vmatprep.subr.mxu0 0.0
    %465 = vmatpush1.msra.mxu0 %v64
    %466 = vmatprep.subr.mxu0 0.0
    %467 = vmatpush1.msra.mxu0 %v63
    %468 = vmatprep.subr.mxu0 0.0
    %469 = vmatpush2.msra.mxu0 0.0
    %470 = vmatprep.subr.mxu0 0.0
    %471 = vmatpush2.msra.mxu0 0.0
    %472 = vmatprep.subr.mxu0 0.0
    %473 = vmatpush2.msra.mxu0 0.0
    %474 = vmatprep.subr.mxu0 0.0
    %475 = vmatpush2.msra.mxu0 0.0
    %476 = vmatprep.subr.mxu0 0.0
    %477 = vmatpush2.msra.mxu0 0.0
    %478 = vmatprep.subr.mxu0 0.0
    %479 = vmatpush2.msra.mxu0 0.0
    %480 = vmatprep.subr.mxu0 0.0
    %481 = vmatpush2.msra.mxu0 0.0
    %482 = vmatprep.subr.mxu0 0.0
    %483 = vmatpush2.msra.mxu0 0.0
    %484 = vmatprep.subr.mxu0 0.0
    %485 = vmatpush2.msra.mxu0 0.0
    %486 = vmatprep.subr.mxu0 0.0
    %487 = vmatpush2.msra.mxu0 0.0
    %488 = vmatprep.subr.mxu0 0.0
    %489 = vmatpush2.msra.mxu0 0.0
    %490 = vmatprep.subr.mxu0 0.0
    %491 = vmatpush2.msra.mxu0 0.0
    %492 = vmatprep.subr.mxu0 0.0
    %493 = vmatpush2.msra.mxu0 0.0
    %494 = vmatprep.subr.mxu0 0.0
    %495 = vmatpush2.msra.mxu0 0.0
    %496 = vmatprep.subr.mxu0 0.0
    %497 = vmatpush2.msra.mxu0 0.0
    %498 = vmatprep.subr.mxu0 0.0
    %499 = vmatpush2.msra.mxu0 0.0
    %500 = vmatprep.mubr.f32.mxu0 0.0
    %501 = vmatmul.mubr.f32.gmra.mxu0 %v434
    %v502 = vpop.f32.mrf.mxu0
    %v503 = vadd.f32 0.0, %v502
    %v504 = vpop.f32.mrf.mxu0
    %505 = vdwg.mxu0
    %506 = vst.msk [vmem:[#allocation8] sm:$0xff] %vm69, %v430
    %507 = vst.msk [vmem:[#allocation8 + $0x8] sm:$0xff] %vm69, %v503
    %508 = vst.msk [vmem:[#allocation9] sm:$0xff] %vm337, %v358
    %509 = vst.msk [vmem:[#allocation9 + $0x8] sm:$0xff] %vm337, %v359
    // Predicated region
    $region26: #{tpu_custom_call.1} parent=1 // pred_check
      _
    $region27: #{tpu_custom_call.1} parent=1 // pred_check_branch
      %511 = sbr.rel (0) target = $region29
    $region28: #{tpu_custom_call.1} parent=1 // pred_region
      %s513 = ssub.s32 256, 256
      %514 = vsyncadd [#allocation4], %s513
      %s515 = sshll.u32 [#allocation8], 4
      %s516 = int_to_ptr.vmem [resolvable:$true] %s515
      %521 = dma.vmem_to_hbm [thread:$0]  %s516, 256, %s3, [#allocation4], 128, 128, 8
    $region29: #{tpu_custom_call.1} parent=1 // pred_fallthru
      _
    // Predicated region
    $region30: #{tpu_custom_call.1} parent=1 // pred_check
      _
    $region31: #{tpu_custom_call.1} parent=1 // pred_check_branch
      %523 = sbr.rel (0) target = $region33
    $region32: #{tpu_custom_call.1} parent=1 // pred_region
      %s525 = ssub.s32 256, 256
      %526 = vsyncadd [#allocation10], %s525
      %s527 = sshll.u32 [#allocation9], 4
      %s528 = int_to_ptr.vmem [resolvable:$true] %s527
      %533 = dma.vmem_to_hbm [thread:$0]  %s528, 256, %s4, [#allocation10], 128, 128, 8
    $region33: #{tpu_custom_call.1} parent=1 // pred_fallthru
      _
    // Predicated region
    $region34: #{tpu_custom_call.1} parent=1 // pred_check
      _
    $region35: #{tpu_custom_call.1} parent=1 // pred_check_branch
      %535 = sbr.rel (0) target = $region37
    $region36: #{tpu_custom_call.1} parent=1 // pred_region
      %536 = dma.done [#allocation4], 256
    $region37: #{tpu_custom_call.1} parent=1 // pred_fallthru
      _
    // Predicated region
    $region38: #{tpu_custom_call.1} parent=1 // pred_check
      _
    $region39: #{tpu_custom_call.1} parent=1 // pred_check_branch
      %538 = sbr.rel (0) target = $region41
    $region40: #{tpu_custom_call.1} parent=1 // pred_region
      %539 = dma.done [#allocation10], 256
    $region41: #{tpu_custom_call.1} parent=1 // pred_fallthru
      _
    %540 = vsyncpa [#allocation3], 1
    %541 = vsyncpa [#allocation6], 1
    %542 = vsyncpa [#allocation4], 1
    %543 = vsyncpa [#allocation10], 1

</llo_original>
